<compile_context>
chip_gen: v5e
topology: v5e:2x2
jax: 0.10.0
libtpu: 0.0.40
codegen_flags: <defaults>
</compile_context>

<pallas_src>
import jax
import jax.numpy as jnp
import numpy as np
from jax import lax
from jax.experimental import pallas as pl
from jax.experimental.pallas import tpu as pltpu

# Static configuration (matches the module's __init__ at small sizes).
INPUT_SIZE = 16
HIDDEN_SIZE = 32
OUTPUT_SIZE = 8
NUM_HIDDEN_LAYERS = 3

MAX_BATCH_TILE = 1024          # lanes per grid step (multiple of 128)

# ---- packed-weight slab layout (feature-major: weights stored (out, in)) ----
_CAT = HIDDEN_SIZE + INPUT_SIZE          # 48 : concat width [x | inp]
_ONES_COL = _CAT                         # 48 : bias column (ones row in xcat)
_PACK_COLS = _CAT + 8                    # 56 : 48 + ones col + 7 zero pad
_IN_ROW = 0                              # rows  0..31 : linear_in section
_HID_ROW0 = HIDDEN_SIZE                  # rows 32..127: 3 hidden sections
_OUT_ROW = HIDDEN_SIZE * (1 + NUM_HIDDEN_LAYERS)   # 128: linear_out section
_PACK_ROWS = _OUT_ROW + 8                # 136 total rows (8-aligned)


def _mlp_kernel(inp_ref, w_ref, out_ref):
    """Forward for one batch tile, feature-major: (features, BATCH_TILE)."""
    H, I, L, O = HIDDEN_SIZE, INPUT_SIZE, NUM_HIDDEN_LAYERS, OUTPUT_SIZE
    TB = inp_ref.shape[1]

    inp = inp_ref[...]                                        # (I, TB)
    # Constant-1 row (plus 7 zero pad rows) used to fold biases into the dots.
    ones8 = (lax.broadcasted_iota(jnp.int32, (8, TB), 0) == 0).astype(
        jnp.float32)
    tail = jnp.concatenate([inp, ones8], axis=0)              # (I+8, TB) = (24, TB)

    # x = relu(linear_in(inp));  section = [W_in^T | b_in | 0], shape (H, 24)
    w_in = w_ref[_IN_ROW:_IN_ROW + H, 0:I + 8]
    x = jnp.maximum(
        jnp.dot(w_in, tail, preferred_element_type=jnp.float32), 0.0)   # (H, TB)

    # Dense hidden layers: x = relu(W_i @ cat([x, inp, 1]))  -- one dot each.
    for i in range(L):                                        # static unroll
        r = _HID_ROW0 + i * H
        xa = jnp.concatenate([x, tail], axis=0)               # (56, TB)
        x = jnp.maximum(
            jnp.dot(w_ref[r:r + H, :], xa,
                    preferred_element_type=jnp.float32), 0.0)            # (H, TB)

    # linear_out (no activation); inp columns of the section are zero,
    # bias folded via the ones row.
    xa = jnp.concatenate([x, tail], axis=0)                   # (56, TB)
    out_ref[...] = jnp.dot(w_ref[_OUT_ROW:_OUT_ROW + O, :], xa,
                           preferred_element_type=jnp.float32)            # (O, TB)


def pack_params(params):
    """Pack natural-shape params into one (136, 56) f32 slab. Call ONCE,
    outside the per-step forward path."""
    H, I, O, L = HIDDEN_SIZE, INPUT_SIZE, OUTPUT_SIZE, NUM_HIDDEN_LAYERS
    wp = np.zeros((_PACK_ROWS, _PACK_COLS), np.float32)

    # linear_in: cols 0..15 = W_in^T (out,in); col 16 = b_in  (matches `tail`)
    wp[_IN_ROW:_IN_ROW + H, 0:I] = np.asarray(params["w_in"]).T
    wp[_IN_ROW:_IN_ROW + H, I] = np.asarray(params["b_in"])[0]

    # hidden layers: cols 0..31 = x-part^T, cols 32..47 = inp-part^T,
    # col 48 = bias (ones row).  Ordering matches torch.cat([x, inp], dim=1).
    for i in range(L):
        r = _HID_ROW0 + i * H
        wp[r:r + H, 0:H] = np.asarray(params["w_hx"][i]).T
        wp[r:r + H, H:H + I] = np.asarray(params["w_hi"][i]).T
        wp[r:r + H, _ONES_COL] = np.asarray(params["b_h"][i, 0])

    # linear_out: cols 0..31 = W_out^T; inp cols stay 0; col 48 = b_out.
    wp[_OUT_ROW:_OUT_ROW + O, 0:H] = np.asarray(params["w_out"]).T
    wp[_OUT_ROW:_OUT_ROW + O, _ONES_COL] = np.asarray(params["b_out"])[0]
    return jnp.asarray(wp)


def _choose_batch_tile(b):
    """Lane-aligned batch tile: >=128, <=1024, and (when possible) splits the
    batch into >=2 balanced tiles so both v7x TensorCores get work."""
    half = -(-b // 2)                                # cdiv(b, 2)
    tb = ((half + 127) // 128) * 128                 # round up to 128 lanes
    return max(128, min(MAX_BATCH_TILE, tb))


@jax.jit
def mlp_forward(inp, wpack):
    """inp: (B, INPUT_SIZE) f32, wpack: packed slab from pack_params().
    Returns (B, OUTPUT_SIZE) f32."""
    B, I = inp.shape
    assert I == INPUT_SIZE
    tb = _choose_batch_tile(B)
    n_tiles = pl.cdiv(B, tb)
    b_pad = n_tiles * tb

    # Feature-major staging: (I, b_pad); padded columns are zeros (finite),
    # their outputs are sliced away below.
    inp_t = jnp.pad(inp, ((0, b_pad - B), (0, 0))).T

    out_t = pl.pallas_call(
        _mlp_kernel,
        out_shape=jax.ShapeDtypeStruct((OUTPUT_SIZE, b_pad), jnp.float32),
        grid=(n_tiles,),
        in_specs=[
            pl.BlockSpec((INPUT_SIZE, tb), lambda b: (0, b)),
            # Constant index_map -> weight slab stays VMEM-resident.
            pl.BlockSpec((_PACK_ROWS, _PACK_COLS), lambda b: (0, 0)),
        ],
        out_specs=pl.BlockSpec((OUTPUT_SIZE, tb), lambda b: (0, b)),
        compiler_params=pltpu.CompilerParams(
            dimension_semantics=("parallel",)),
    )(inp_t, wpack)

    return out_t[:, :B].T


def init_params(key):
    """Deterministic init matching PyTorch Linear shapes (stored transposed)."""
    I, H, O, L = INPUT_SIZE, HIDDEN_SIZE, OUTPUT_SIZE, NUM_HIDDEN_LAYERS
    ks = jax.random.split(key, 8)

    def uniform(k, shape, fan_in):
        bound = 1.0 / np.sqrt(fan_in)
        return jax.random.uniform(k, shape, jnp.float32, -bound, bound)

    # hidden layers see fan_in = H + I (the concatenated width)
    return {
        "w_in": uniform(ks[0], (I, H), I),
        "b_in": uniform(ks[1], (1, H), I),
        "w_hx": uniform(ks[2], (L, H, H), H + I),
        "w_hi": uniform(ks[3], (L, I, H), H + I),
        "b_h":  uniform(ks[4], (L, 1, H), H + I),
        "w_out": uniform(ks[5], (H, O), H),
        "b_out": uniform(ks[6], (1, O), H),
    }


def mlp_reference(inp, params):
    """Pure-JAX reference reproducing the PyTorch forward (explicit cat)."""
    x = jax.nn.relu(inp @ params["w_in"] + params["b_in"])
    for i in range(NUM_HIDDEN_LAYERS):
        w_cat = jnp.concatenate([params["w_hx"][i], params["w_hi"][i]], axis=0)
        xc = jnp.concatenate([x, inp], axis=1)
        x = jax.nn.relu(xc @ w_cat + params["b_h"][i])
    return x @ params["w_out"] + params["b_out"]


if __name__ == "__main__":
    key = jax.random.PRNGKey(0)
    k_inp, k_params = jax.random.split(key)

    BATCH = 300                     # 2 batch tiles of 256 -> exercises the grid
    inp = jax.random.normal(k_inp, (BATCH, INPUT_SIZE), jnp.float32)
    params = init_params(k_params)

    # Packing is hoisted out of the forward path: build the slab once.
    wpack = pack_params(params)

    out = mlp_forward(inp, wpack)
    out = jax.block_until_ready(out)

    ref = mlp_reference(inp, params)
    np.testing.assert_allclose(np.asarray(out), np.asarray(ref),
                               rtol=1e-5, atol=1e-5)
    print("KERNEL_OK")
</pallas_src>

<mosaic_0001>
module attributes {stable_mosaic.version = 11 : i64} {
  func.func @_mlp_kernel(%arg0: i32, %arg1: memref<16x256xf32, #tpu.memory_space<vmem>>, %arg2: memref<136x56xf32, #tpu.memory_space<vmem>>, %arg3: memref<8x256xf32, #tpu.memory_space<vmem>>) attributes {dimension_semantics = [#tpu.dimension_semantics<parallel>], iteration_bounds = array<i64: 2>, scalar_prefetch = 0 : i64, scratch_operands = 0 : i64, tpu.core_type = #tpu.core_type<tc>, window_params = [{transform_indices = @transform_0, window_bounds = array<i64: 16, 256>}, {pipeline_mode = #tpu.pipeline_mode<synchronous>, transform_indices = @transform_1, window_bounds = array<i64: 136, 56>}, {transform_indices = @transform_2, window_bounds = array<i64: 8, 256>}]} {
    %c0 = arith.constant 0 : index
    %c0_0 = arith.constant 0 : index
    %0 = vector.load %arg1[%c0, %c0_0] : memref<16x256xf32, #tpu.memory_space<vmem>>, vector<16x256xf32>
    %1 = tpu.iota {dimensions = array<i32: 0>} : vector<8x256xi32>
    %c0_i32 = arith.constant 0 : i32
    %2 = vector.broadcast %c0_i32 : i32 to vector<8x256xi32>
    %3 = arith.cmpi eq, %1, %2 : vector<8x256xi32>
    %4 = arith.extui %3 : vector<8x256xi1> to vector<8x256xi32>
    %5 = arith.sitofp %4 : vector<8x256xi32> to vector<8x256xf32>
    %6 = tpu.concatenate %0, %5 in 0 : vector<16x256xf32>, vector<8x256xf32> -> vector<24x256xf32>
    %c0_1 = arith.constant 0 : index
    %c0_2 = arith.constant 0 : index
    %7 = vector.load %arg2[%c0_1, %c0_2] : memref<136x56xf32, #tpu.memory_space<vmem>>, vector<32x24xf32>
    %cst = arith.constant dense<0.000000e+00> : vector<32x256xf32>
    %8 = tpu.matmul %7, %6, %cst {dimension_numbers = #tpu.dot_dimension_numbers<[1], [0], [0], [1], [0, 0, 1, 1], [], []>} : vector<32x24xf32>, vector<24x256xf32>, vector<32x256xf32> -> vector<32x256xf32>
    %cst_3 = arith.constant 0.000000e+00 : f32
    %9 = vector.broadcast %cst_3 : f32 to vector<32x256xf32>
    %10 = arith.maximumf %8, %9 : vector<32x256xf32>
    %11 = tpu.concatenate %10, %6 in 0 : vector<32x256xf32>, vector<24x256xf32> -> vector<56x256xf32>
    %c32 = arith.constant 32 : index
    %c0_4 = arith.constant 0 : index
    %12 = vector.load %arg2[%c32, %c0_4] : memref<136x56xf32, #tpu.memory_space<vmem>>, vector<32x56xf32>
    %cst_5 = arith.constant dense<0.000000e+00> : vector<32x256xf32>
    %13 = tpu.matmul %12, %11, %cst_5 {dimension_numbers = #tpu.dot_dimension_numbers<[1], [0], [0], [1], [0, 0, 1, 1], [], []>} : vector<32x56xf32>, vector<56x256xf32>, vector<32x256xf32> -> vector<32x256xf32>
    %cst_6 = arith.constant 0.000000e+00 : f32
    %14 = vector.broadcast %cst_6 : f32 to vector<32x256xf32>
    %15 = arith.maximumf %13, %14 : vector<32x256xf32>
    %16 = tpu.concatenate %15, %6 in 0 : vector<32x256xf32>, vector<24x256xf32> -> vector<56x256xf32>
    %c64 = arith.constant 64 : index
    %c0_7 = arith.constant 0 : index
    %17 = vector.load %arg2[%c64, %c0_7] : memref<136x56xf32, #tpu.memory_space<vmem>>, vector<32x56xf32>
    %cst_8 = arith.constant dense<0.000000e+00> : vector<32x256xf32>
    %18 = tpu.matmul %17, %16, %cst_8 {dimension_numbers = #tpu.dot_dimension_numbers<[1], [0], [0], [1], [0, 0, 1, 1], [], []>} : vector<32x56xf32>, vector<56x256xf32>, vector<32x256xf32> -> vector<32x256xf32>
    %cst_9 = arith.constant 0.000000e+00 : f32
    %19 = vector.broadcast %cst_9 : f32 to vector<32x256xf32>
    %20 = arith.maximumf %18, %19 : vector<32x256xf32>
    %21 = tpu.concatenate %20, %6 in 0 : vector<32x256xf32>, vector<24x256xf32> -> vector<56x256xf32>
    %c96 = arith.constant 96 : index
    %c0_10 = arith.constant 0 : index
    %22 = vector.load %arg2[%c96, %c0_10] : memref<136x56xf32, #tpu.memory_space<vmem>>, vector<32x56xf32>
    %cst_11 = arith.constant dense<0.000000e+00> : vector<32x256xf32>
    %23 = tpu.matmul %22, %21, %cst_11 {dimension_numbers = #tpu.dot_dimension_numbers<[1], [0], [0], [1], [0, 0, 1, 1], [], []>} : vector<32x56xf32>, vector<56x256xf32>, vector<32x256xf32> -> vector<32x256xf32>
    %cst_12 = arith.constant 0.000000e+00 : f32
    %24 = vector.broadcast %cst_12 : f32 to vector<32x256xf32>
    %25 = arith.maximumf %23, %24 : vector<32x256xf32>
    %26 = tpu.concatenate %25, %6 in 0 : vector<32x256xf32>, vector<24x256xf32> -> vector<56x256xf32>
    %c128 = arith.constant 128 : index
    %c0_13 = arith.constant 0 : index
    %27 = vector.load %arg2[%c128, %c0_13] : memref<136x56xf32, #tpu.memory_space<vmem>>, vector<8x56xf32>
    %cst_14 = arith.constant dense<0.000000e+00> : vector<8x256xf32>
    %28 = tpu.matmul %27, %26, %cst_14 {dimension_numbers = #tpu.dot_dimension_numbers<[1], [0], [0], [1], [0, 0, 1, 1], [], []>} : vector<8x56xf32>, vector<56x256xf32>, vector<8x256xf32> -> vector<8x256xf32>
    %c0_15 = arith.constant 0 : index
    %c0_16 = arith.constant 0 : index
    %29 = vector.load %arg3[%c0_15, %c0_16] : memref<8x256xf32, #tpu.memory_space<vmem>>, vector<8x256xf32>
    tpu.vector_store %arg3[%c0_15, %c0_16], %28 {strides = array<i32>} : memref<8x256xf32, #tpu.memory_space<vmem>>, vector<8x256xf32>,
    return
  }
  func.func @transform_0(%arg0: i32) -> (i32, i32) {
    %c0_i32 = arith.constant 0 : i32
    %c0_i32_0 = arith.constant 0 : i32
    return %c0_i32, %arg0 : i32, i32
  }
  func.func @transform_1(%arg0: i32) -> (i32, i32) {
    %c0_i32 = arith.constant 0 : i32
    %c0_i32_0 = arith.constant 0 : i32
    %c0_i32_1 = arith.constant 0 : i32
    return %c0_i32, %c0_i32_0 : i32, i32
  }
  func.func @transform_2(%arg0: i32) -> (i32, i32) {
    %c0_i32 = arith.constant 0 : i32
    %c0_i32_0 = arith.constant 0 : i32
    return %c0_i32, %arg0 : i32, i32
  }
}

</mosaic_0001>

<llo_original>
// kernel: mlp_forward.1
$region0: #{mlp_forward.1}
  #allocation0 [shape = 'u32[]', space=smem, size = 0x4, offset = 0x4, fixed_abs, tag = 'smem constant byte address 0x4 - core index']
  #allocation1 [shape = 'u32[72,128]{1,0:T(1,128)}', space=vmem, size = 0x9000, scoped, tag = 'internal scratch']
  %s0 = inlined_call_operand.vmem [shape: f32[16,512], index: 0, kind: input, shape index: {}]
  %s1 = inlined_call_operand.vmem [shape: f32[136,56], index: 1, kind: input, shape index: {}]
  %s2 = inlined_call_operand.vmem [shape: f32[8,512], index: 2, kind: output, shape index: {}]
  %s3 = sld [smem:[#allocation0]]
  $region64: #{mlp_forward.1} parent=0
    _
  %s5 = ssub.s32 1, %s3
  %s6 = scalar_select 0, %s5, %s3
  $region1: #{mlp_forward.1} parent=0
    #allocation2 [shape = 'u8[32768]{0}', space=vmem, size = 0x8000, scoped, tag = 'input window, operand 0']
    loop: start=0, step=1, limit=4
    $region2: #{mlp_forward.1} parent=1 // loop_pre_header
      _
    $region3: #{mlp_forward.1} parent=1 // loop_header
      %s8 = sphi 0, %s12
      %p9 = scmp.ge.s32.totalorder %s8, 4
      %s18 = sphi 0, %s20
      %s21 = sphi 0, %s18
      %s22 = sphi 0, %s21
      %s38 = sphi 0, %s22
      %s42 = sphi 0, %s42
      %s44 = sphi 0, %s42
      %s45 = sphi 0, %s44
      %s59 = sphi 0, %s45
      %s65 = sphi 0, %s67
      %s68 = sphi 0, %s65
      %s69 = sphi 0, %s68
      %s85 = sphi 0, %s69
    $region4: #{mlp_forward.1} parent=1 // loop_header_branch
      %11 = sbr.rel (%p9) target = $region8
    $region5: #{mlp_forward.1} parent=1 // loop_body
      %s13 = ssub.s32 %s8, 1
      %s14 = ssub.s32 %s8, 2
      %s15 = sadd.s32 %s8, 1
      %s16 = ssub.s32 %s8, %s15
      %p17 = scmp.eq.s32.totalorder %s16, 0
      %s19 = sadd.s32 %s18, 1
      %s20 = scalar_select %p17, %s18, %s19
      %p23 = pneg %p17
      %p24 = scmp.eq.s32.totalorder %s8, 1
      %p25 = por %p23, %p24
      %p26 = scmp.ne.s32.totalorder %s18, %s21
      %p27 = scmp.eq.s32.totalorder %s8, 0
      %p28 = por %p26, %p27
      %p29 = scmp.ne.s32.totalorder %s18, %s21
      %p30 = scmp.eq.s32.totalorder %s13, 1
      %p31 = por %p29, %p30
      %p32 = scmp.ne.s32.totalorder %s21, %s22
      %p33 = scmp.eq.s32.totalorder %s13, 0
      %p34 = por %p32, %p33
      %p35 = scmp.ne.s32.totalorder %s21, %s22
      %p36 = scmp.eq.s32.totalorder %s14, 1
      %p37 = por %p35, %p36
      %p39 = scmp.ne.s32.totalorder %s22, %s38
      %p40 = scmp.eq.s32.totalorder %s14, 0
      %p41 = por %p39, %p40
      %s43 = sadd.s32 %s42, 1
      %p46 = scmp.eq.s32.totalorder %s8, 1
      %p47 = scmp.ne.s32.totalorder %s42, %s44
      %p48 = scmp.eq.s32.totalorder %s8, 0
      %p49 = por %p47, %p48
      %p50 = scmp.ne.s32.totalorder %s42, %s44
      %p51 = scmp.eq.s32.totalorder %s13, 1
      %p52 = por %p50, %p51
      %p53 = scmp.ne.s32.totalorder %s44, %s45
      %p54 = scmp.eq.s32.totalorder %s13, 0
      %p55 = por %p53, %p54
      %p56 = scmp.ne.s32.totalorder %s44, %s45
      %p57 = scmp.eq.s32.totalorder %s14, 1
      %p58 = por %p56, %p57
      %p60 = scmp.ne.s32.totalorder %s45, %s59
      %p61 = scmp.eq.s32.totalorder %s14, 0
      %p62 = por %p60, %p61
      %s63 = ssub.s32 %s8, %s15
      %p64 = scmp.eq.s32.totalorder %s63, 0
      %s66 = sadd.s32 %s65, 1
      %s67 = scalar_select %p64, %s65, %s66
      %p70 = pneg %p64
      %p71 = scmp.eq.s32.totalorder %s8, 1
      %p72 = por %p70, %p71
      %p73 = scmp.ne.s32.totalorder %s65, %s68
      %p74 = scmp.eq.s32.totalorder %s8, 0
      %p75 = por %p73, %p74
      %p76 = scmp.ne.s32.totalorder %s65, %s68
      %p77 = scmp.eq.s32.totalorder %s13, 1
      %p78 = por %p76, %p77
      %p79 = scmp.ne.s32.totalorder %s68, %s69
      %p80 = scmp.eq.s32.totalorder %s13, 0
      %p81 = por %p79, %p80
      %p82 = scmp.ne.s32.totalorder %s68, %s69
      %p83 = scmp.eq.s32.totalorder %s14, 1
      %p84 = por %p82, %p83
      %p86 = scmp.ne.s32.totalorder %s69, %s85
      %p87 = scmp.eq.s32.totalorder %s14, 0
      %p88 = por %p86, %p87
      %p89 = scmp.le.s32.totalorder 1, %s8
      %p90 = scmp.lt.s32.totalorder %s8, 3
      %p91 = pnand %p89, %p90
      %p92 = pneg %p91
      // Predicated region
      $region9: #{mlp_forward.1} parent=5 // pred_check
        _
      $region10: #{mlp_forward.1} parent=5 // pred_check_branch
        %94 = sbr.rel (%p91) target = $region12
      $region11: #{mlp_forward.1} parent=5 // pred_region
        %s95 = ssub.s32 %s8, 1
        // Predicated region
        $region13: #{mlp_forward.1} parent=11 // pred_check
          %p96 = pneg %p55
        $region14: #{mlp_forward.1} parent=11 // pred_check_branch
          %98 = sbr.rel (%p96) target = $region16
        $region15: #{mlp_forward.1} parent=11 // pred_region
          _
        $region16: #{mlp_forward.1} parent=11 // pred_fallthru
          _
      $region12: #{mlp_forward.1} parent=5 // pred_fallthru
        _
      %p99 = scmp.lt.s32.totalorder %s8, 2
      // Predicated region
      $region17: #{mlp_forward.1} parent=5 // pred_check
        %p100 = pneg %p99
      $region18: #{mlp_forward.1} parent=5 // pred_check_branch
        %102 = sbr.rel (%p100) target = $region20
      $region19: #{mlp_forward.1} parent=5 // pred_region
        // Predicated region
        $region21: #{mlp_forward.1} parent=19 // pred_check
          %p103 = pneg %p28
        $region22: #{mlp_forward.1} parent=19 // pred_check_branch
          %105 = sbr.rel (%p103) target = $region24
        $region23: #{mlp_forward.1} parent=19 // pred_region
          %s106 = sand.u32 %s18, 1
          %s107 = sand.u32 %s18, 1
          %s108 = smul.addr %s107, 32
          %s109 = scalar_lea.vmem [#allocation2], %s108
          %s110 = smul.u32 2, %s8
          %s111 = smul.addr %s110, 8
          %s112 = scalar_lea.vmem %s0, %s111
          // Predicated region
          $region25: #{mlp_forward.1} parent=23 // pred_check
            _
          $region26: #{mlp_forward.1} parent=23 // pred_check_branch
            %114 = sbr.rel (0) target = $region28
          $region27: #{mlp_forward.1} parent=23 // pred_region
            // Predicated region
            $region29: #{mlp_forward.1} parent=27 // pred_check
              _
            $region30: #{mlp_forward.1} parent=27 // pred_check_branch
              %116 = sbr.rel (0) target = $region32
            $region31: #{mlp_forward.1} parent=27 // pred_region
              loop: start=0, step=1, limit=1
              $region33: #{mlp_forward.1} parent=31 // loop_pre_header
                _
              $region34: #{mlp_forward.1} parent=31 // loop_header
                %s118 = sphi 0, %s122
                %p119 = scmp.ge.s32.totalorder %s118, 1
                %s123 = sphi %s112, %s112
                %s124 = sphi %s109, %s109
              $region35: #{mlp_forward.1} parent=31 // loop_header_branch
                %121 = sbr.rel (%p119) target = $region39
              $region36: #{mlp_forward.1} parent=31 // loop_body
                %v125 = vld [vmem:[%s123] sm:$0xff]
                %126 = vst [vmem:[%s124] sm:$0xff] %v125
                %v127 = vld [vmem:[%s123 + $0x8] sm:$0xff]
                %128 = vst [vmem:[%s124 + $0x8] sm:$0xff] %v127
                %v129 = vld [vmem:[%s123 + $0x20] sm:$0xff]
                %130 = vst [vmem:[%s124 + $0x10] sm:$0xff] %v129
                %v131 = vld [vmem:[%s123 + $0x28] sm:$0xff]
                %132 = vst [vmem:[%s124 + $0x18] sm:$0xff] %v131
              $region37: #{mlp_forward.1} parent=31 // loop_footer
                %s122 = sadd.s32 1, %s118
              $region38: #{mlp_forward.1} parent=31 // loop_footer_branch
                %117 = sbr.rel target = $region34
              $region39: #{mlp_forward.1} parent=31 // loop_exit
                _
            $region32: #{mlp_forward.1} parent=27 // pred_fallthru
              _
            // Predicated region
            $region40: #{mlp_forward.1} parent=27 // pred_check
              _
            $region41: #{mlp_forward.1} parent=27 // pred_check_branch
              %134 = sbr.rel target = $region43
            $region42: #{mlp_forward.1} parent=27 // pred_region
              _
            $region43: #{mlp_forward.1} parent=27 // pred_fallthru
              _
          $region28: #{mlp_forward.1} parent=23 // pred_fallthru
            _
          %135 = vnop
        $region24: #{mlp_forward.1} parent=19 // pred_fallthru
          _
      $region20: #{mlp_forward.1} parent=5 // pred_fallthru
        _
      %p136 = scmp.le.s32.totalorder 1, %s8
      %p137 = scmp.lt.s32.totalorder %s8, 3
      %p138 = pnand %p136, %p137
      %p139 = pneg %p138
      // Predicated region
      $region44: #{mlp_forward.1} parent=5 // pred_check
        _
      $region45: #{mlp_forward.1} parent=5 // pred_check_branch
        %141 = sbr.rel (%p138) target = $region47
      $region46: #{mlp_forward.1} parent=5 // pred_region
        %s142 = ssub.s32 %s8, 1
        %s143 = sand.u32 %s21, 1
        %s144 = sand.u32 %s21, 1
        %s145 = smul.addr %s144, 32
        %s146 = scalar_lea.vmem [#allocation2], %s145
        // Predicated region
        $region48: #{mlp_forward.1} parent=46 // pred_check
          %p147 = pneg %p34
        $region49: #{mlp_forward.1} parent=46 // pred_check_branch
          %149 = sbr.rel (%p147) target = $region51
        $region50: #{mlp_forward.1} parent=46 // pred_region
          _
        $region51: #{mlp_forward.1} parent=46 // pred_fallthru
          _
        %s150 = sand.u32 %s21, 1
        %s151 = sand.u32 %s21, 1
        %s152 = smul.addr %s151, 32
        %s153 = scalar_lea.vmem [#allocation2], %s152
        %p154 = pneg %p34
        %p155 = pneg %p31
        %p156 = pneg %p55
        %p157 = pneg %p52
        %p158 = pneg %p81
        %p159 = pneg %p78
        %s160 = smul.u32 2, %s13
        %p161 = scmp.lt.s32.totalorder %s160, 3
        %s162 = scalar_select %p161, %s160, 3
        %s163 = smul.addr %s162, 8
        %s164 = scalar_lea.vmem %s2, %s163
        %s165 = smul.u32 2, %s13
        %s166 = smul.u32 2, %s13
        %p167 = scmp.lt.s32.totalorder %s166, 3
        %s168 = scalar_select %p167, %s166, 3
        %s169 = smul.addr %s168, 8
        %s170 = scalar_lea.vmem %s2, %s169
        %s171 = smul.u32 2, %s13
        %v172 = vld [vmem:[%s146] sm:$0xff]
        %v173 = vld [vmem:[%s146 + $0x8] sm:$0xff]
        %v174 = vld [vmem:[%s146 + $0x10] sm:$0xff]
        %v175 = vld [vmem:[%s146 + $0x18] sm:$0xff]
        %v176 = vlaneseq
        %v177 = vshrl.u32 %v176, 7
        %vm178 = vcmp.eq.s32.totalorder %v177, 0
        %v179 = vsel %vm178, 1, 0
        %v180 = vcvt.s32.f32 %v179
        %v181 = vld [vmem:[%s1] sm:$0xff]
        %v182 = vld [vmem:[%s1 + $0x8] sm:$0xff]
        %v183 = vld [vmem:[%s1 + $0x10] sm:$0xff]
        %v184 = vld [vmem:[%s1 + $0x18] sm:$0xff]
        %vm185 = vcmask 195584
        %v187 = vsel %vm185, %v181, 0
        %v190 = vsel %vm185, %v182, 0
        %v193 = vsel %vm185, %v183, 0
        %v196 = vsel %vm185, %v184, 0
        %198 = vmatpush.msra.mxu0 0.0
        %199 = vmatpush.msra.mxu0 0.0
        %200 = vmatpush.msra.mxu0 0.0
        %201 = vmatpush.msra.mxu0 0.0
        %202 = vmatpush.msra.mxu0 0.0
        %203 = vmatpush.msra.mxu0 0.0
        %204 = vmatpush.msra.mxu0 0.0
        %205 = vmatpush.msra.mxu0 0.0
        %206 = vmatpush.msra.mxu0 0.0
        %207 = vmatpush.msra.mxu0 0.0
        %208 = vmatpush.msra.mxu0 0.0
        %209 = vmatpush.msra.mxu0 0.0
        %210 = vmatpush.msra.mxu0 0.0
        %211 = vmatpush.msra.mxu0 %v180
        %212 = vmatpush.msra.mxu0 %v174
        %213 = vmatpush.msra.mxu0 %v172
        %214 = vmatmul.f32.gmra.mxu0 %v187
        %v215 = vpop.f32.mrf.mxu0
        %v216 = vadd.f32 0.0, %v215
        %217 = vmatmul.f32.gmra.mxu0 %v190
        %v218 = vpop.f32.mrf.mxu0
        %v219 = vadd.f32 0.0, %v218
        %220 = vmatmul.f32.gmra.mxu0 %v193
        %v221 = vpop.f32.mrf.mxu0
        %v222 = vadd.f32 0.0, %v221
        %223 = vmatmul.f32.gmra.mxu0 %v196
        %v224 = vpop.f32.mrf.mxu0
        %v225 = vadd.f32 0.0, %v224
        %226 = vdwg.mxu0
        %227 = vmatpush.msra.mxu0 0.0
        %228 = vmatpush.msra.mxu0 0.0
        %229 = vmatpush.msra.mxu0 0.0
        %230 = vmatpush.msra.mxu0 0.0
        %231 = vmatpush.msra.mxu0 0.0
        %232 = vmatpush.msra.mxu0 0.0
        %233 = vmatpush.msra.mxu0 0.0
        %234 = vmatpush.msra.mxu0 0.0
        %235 = vmatpush.msra.mxu0 0.0
        %236 = vmatpush.msra.mxu0 0.0
        %237 = vmatpush.msra.mxu0 0.0
        %238 = vmatpush.msra.mxu0 0.0
        %239 = vmatpush.msra.mxu0 0.0
        %240 = vmatpush.msra.mxu0 %v180
        %241 = vmatpush.msra.mxu0 %v175
        %242 = vmatpush.msra.mxu0 %v173
        %243 = vmatmul.f32.gmra.mxu0 %v187
        %v244 = vpop.f32.mrf.mxu0
        %v245 = vadd.f32 0.0, %v244
        %246 = vmatmul.f32.gmra.mxu0 %v190
        %v247 = vpop.f32.mrf.mxu0
        %v248 = vadd.f32 0.0, %v247
        %249 = vmatmul.f32.gmra.mxu0 %v193
        %v250 = vpop.f32.mrf.mxu0
        %v251 = vadd.f32 0.0, %v250
        %252 = vmatmul.f32.gmra.mxu0 %v196
        %v253 = vpop.f32.mrf.mxu0
        %v254 = vadd.f32 0.0, %v253
        %255 = vdwg.mxu0
        %v256 = vmax.f32 %v216, 0.0
        %v257 = vmax.f32 %v245, 0.0
        %v258 = vmax.f32 %v219, 0.0
        %v259 = vmax.f32 %v248, 0.0
        %v260 = vmax.f32 %v222, 0.0
        %v261 = vmax.f32 %v251, 0.0
        %v262 = vmax.f32 %v225, 0.0
        %v263 = vmax.f32 %v254, 0.0
        %v264 = vld [vmem:[%s1 + $0x20] sm:$0xff]
        %v265 = vld [vmem:[%s1 + $0x28] sm:$0xff]
        %v266 = vld [vmem:[%s1 + $0x30] sm:$0xff]
        %v267 = vld [vmem:[%s1 + $0x38] sm:$0xff]
        %vm268 = vcmask 457728
        %v270 = vsel %vm268, %v264, 0
        %v273 = vsel %vm268, %v265, 0
        %v276 = vsel %vm268, %v266, 0
        %v279 = vsel %vm268, %v267, 0
        %281 = vmatpush.msra.mxu0 0.0
        %282 = vmatpush.msra.mxu0 0.0
        %283 = vmatpush.msra.mxu0 0.0
        %284 = vmatpush.msra.mxu0 0.0
        %285 = vmatpush.msra.mxu0 0.0
        %286 = vmatpush.msra.mxu0 0.0
        %287 = vmatpush.msra.mxu0 0.0
        %288 = vmatpush.msra.mxu0 0.0
        %289 = vmatpush.msra.mxu0 0.0
        %290 = vmatpush.msra.mxu0 %v180
        %291 = vmatpush.msra.mxu0 %v174
        %292 = vmatpush.msra.mxu0 %v172
        %293 = vmatpush.msra.mxu0 %v262
        %294 = vmatpush.msra.mxu0 %v260
        %295 = vmatpush.msra.mxu0 %v258
        %296 = vmatpush.msra.mxu0 %v256
        %297 = vmatmul.f32.gmra.mxu0 %v270
        %v298 = vpop.f32.mrf.mxu0
        %v299 = vadd.f32 0.0, %v298
        %300 = vmatmul.f32.gmra.mxu0 %v273
        %v301 = vpop.f32.mrf.mxu0
        %v302 = vadd.f32 0.0, %v301
        %303 = vmatmul.f32.gmra.mxu0 %v276
        %v304 = vpop.f32.mrf.mxu0
        %v305 = vadd.f32 0.0, %v304
        %306 = vmatmul.f32.gmra.mxu0 %v279
        %v307 = vpop.f32.mrf.mxu0
        %v308 = vadd.f32 0.0, %v307
        %309 = vdwg.mxu0
        %310 = vmatpush.msra.mxu0 0.0
        %311 = vmatpush.msra.mxu0 0.0
        %312 = vmatpush.msra.mxu0 0.0
        %313 = vmatpush.msra.mxu0 0.0
        %314 = vmatpush.msra.mxu0 0.0
        %315 = vmatpush.msra.mxu0 0.0
        %316 = vmatpush.msra.mxu0 0.0
        %317 = vmatpush.msra.mxu0 0.0
        %318 = vmatpush.msra.mxu0 0.0
        %319 = vmatpush.msra.mxu0 %v180
        %320 = vmatpush.msra.mxu0 %v175
        %321 = vmatpush.msra.mxu0 %v173
        %322 = vmatpush.msra.mxu0 %v263
        %323 = vmatpush.msra.mxu0 %v261
        %324 = vmatpush.msra.mxu0 %v259
        %325 = vmatpush.msra.mxu0 %v257
        %326 = vmatmul.f32.gmra.mxu0 %v270
        %v327 = vpop.f32.mrf.mxu0
        %v328 = vadd.f32 0.0, %v327
        %329 = vmatmul.f32.gmra.mxu0 %v273
        %v330 = vpop.f32.mrf.mxu0
        %v331 = vadd.f32 0.0, %v330
        %332 = vmatmul.f32.gmra.mxu0 %v276
        %v333 = vpop.f32.mrf.mxu0
        %v334 = vadd.f32 0.0, %v333
        %335 = vmatmul.f32.gmra.mxu0 %v279
        %v336 = vpop.f32.mrf.mxu0
        %v337 = vadd.f32 0.0, %v336
        %338 = vdwg.mxu0
        %v339 = vmax.f32 %v299, 0.0
        %v340 = vmax.f32 %v328, 0.0
        %v341 = vmax.f32 %v302, 0.0
        %v342 = vmax.f32 %v331, 0.0
        %v343 = vmax.f32 %v305, 0.0
        %v344 = vmax.f32 %v334, 0.0
        %v345 = vmax.f32 %v308, 0.0
        %v346 = vmax.f32 %v337, 0.0
        %v347 = vld [vmem:[%s1 + $0x40] sm:$0xff]
        %v348 = vld [vmem:[%s1 + $0x48] sm:$0xff]
        %v349 = vld [vmem:[%s1 + $0x50] sm:$0xff]
        %v350 = vld [vmem:[%s1 + $0x58] sm:$0xff]
        %v352 = vsel %vm268, %v347, 0
        %v355 = vsel %vm268, %v348, 0
        %v358 = vsel %vm268, %v349, 0
        %v361 = vsel %vm268, %v350, 0
        %363 = vmatpush.msra.mxu0 0.0
        %364 = vmatpush.msra.mxu0 0.0
        %365 = vmatpush.msra.mxu0 0.0
        %366 = vmatpush.msra.mxu0 0.0
        %367 = vmatpush.msra.mxu0 0.0
        %368 = vmatpush.msra.mxu0 0.0
        %369 = vmatpush.msra.mxu0 0.0
        %370 = vmatpush.msra.mxu0 0.0
        %371 = vmatpush.msra.mxu0 0.0
        %372 = vmatpush.msra.mxu0 %v180
        %373 = vmatpush.msra.mxu0 %v174
        %374 = vmatpush.msra.mxu0 %v172
        %375 = vmatpush.msra.mxu0 %v345
        %376 = vmatpush.msra.mxu0 %v343
        %377 = vmatpush.msra.mxu0 %v341
        %378 = vmatpush.msra.mxu0 %v339
        %379 = vmatmul.f32.gmra.mxu0 %v352
        %v380 = vpop.f32.mrf.mxu0
        %v381 = vadd.f32 0.0, %v380
        %382 = vmatmul.f32.gmra.mxu0 %v355
        %v383 = vpop.f32.mrf.mxu0
        %v384 = vadd.f32 0.0, %v383
        %385 = vmatmul.f32.gmra.mxu0 %v358
        %v386 = vpop.f32.mrf.mxu0
        %v387 = vadd.f32 0.0, %v386
        %388 = vmatmul.f32.gmra.mxu0 %v361
        %v389 = vpop.f32.mrf.mxu0
        %v390 = vadd.f32 0.0, %v389
        %391 = vdwg.mxu0
        %392 = vmatpush.msra.mxu0 0.0
        %393 = vmatpush.msra.mxu0 0.0
        %394 = vmatpush.msra.mxu0 0.0
        %395 = vmatpush.msra.mxu0 0.0
        %396 = vmatpush.msra.mxu0 0.0
        %397 = vmatpush.msra.mxu0 0.0
        %398 = vmatpush.msra.mxu0 0.0
        %399 = vmatpush.msra.mxu0 0.0
        %400 = vmatpush.msra.mxu0 0.0
        %401 = vmatpush.msra.mxu0 %v180
        %402 = vmatpush.msra.mxu0 %v175
        %403 = vmatpush.msra.mxu0 %v173
        %404 = vmatpush.msra.mxu0 %v346
        %405 = vmatpush.msra.mxu0 %v344
        %406 = vmatpush.msra.mxu0 %v342
        %407 = vmatpush.msra.mxu0 %v340
        %408 = vmatmul.f32.gmra.mxu0 %v352
        %v409 = vpop.f32.mrf.mxu0
        %v410 = vadd.f32 0.0, %v409
        %411 = vmatmul.f32.gmra.mxu0 %v355
        %v412 = vpop.f32.mrf.mxu0
        %v413 = vadd.f32 0.0, %v412
        %414 = vmatmul.f32.gmra.mxu0 %v358
        %v415 = vpop.f32.mrf.mxu0
        %v416 = vadd.f32 0.0, %v415
        %417 = vmatmul.f32.gmra.mxu0 %v361
        %v418 = vpop.f32.mrf.mxu0
        %v419 = vadd.f32 0.0, %v418
        %420 = vdwg.mxu0
        %v421 = vmax.f32 %v381, 0.0
        %v422 = vmax.f32 %v410, 0.0
        %v423 = vmax.f32 %v384, 0.0
        %v424 = vmax.f32 %v413, 0.0
        %v425 = vmax.f32 %v387, 0.0
        %v426 = vmax.f32 %v416, 0.0
        %v427 = vmax.f32 %v390, 0.0
        %v428 = vmax.f32 %v419, 0.0
        %v429 = vld [vmem:[%s1 + $0x60] sm:$0xff]
        %v430 = vld [vmem:[%s1 + $0x68] sm:$0xff]
        %v431 = vld [vmem:[%s1 + $0x70] sm:$0xff]
        %v432 = vld [vmem:[%s1 + $0x78] sm:$0xff]
        %v434 = vsel %vm268, %v429, 0
        %v437 = vsel %vm268, %v430, 0
        %v440 = vsel %vm268, %v431, 0
        %v443 = vsel %vm268, %v432, 0
        %445 = vmatpush.msra.mxu0 0.0
        %446 = vmatpush.msra.mxu0 0.0
        %447 = vmatpush.msra.mxu0 0.0
        %448 = vmatpush.msra.mxu0 0.0
        %449 = vmatpush.msra.mxu0 0.0
        %450 = vmatpush.msra.mxu0 0.0
        %451 = vmatpush.msra.mxu0 0.0
        %452 = vmatpush.msra.mxu0 0.0
        %453 = vmatpush.msra.mxu0 0.0
        %454 = vmatpush.msra.mxu0 %v180
        %455 = vmatpush.msra.mxu0 %v174
        %456 = vmatpush.msra.mxu0 %v172
        %457 = vmatpush.msra.mxu0 %v427
        %458 = vmatpush.msra.mxu0 %v425
        %459 = vmatpush.msra.mxu0 %v423
        %460 = vmatpush.msra.mxu0 %v421
        %461 = vmatmul.f32.gmra.mxu0 %v434
        %v462 = vpop.f32.mrf.mxu0
        %v463 = vadd.f32 0.0, %v462
        %464 = vmatmul.f32.gmra.mxu0 %v437
        %v465 = vpop.f32.mrf.mxu0
        %v466 = vadd.f32 0.0, %v465
        %467 = vmatmul.f32.gmra.mxu0 %v440
        %v468 = vpop.f32.mrf.mxu0
        %v469 = vadd.f32 0.0, %v468
        %470 = vmatmul.f32.gmra.mxu0 %v443
        %v471 = vpop.f32.mrf.mxu0
        %v472 = vadd.f32 0.0, %v471
        %473 = vdwg.mxu0
        %474 = vmatpush.msra.mxu0 0.0
        %475 = vmatpush.msra.mxu0 0.0
        %476 = vmatpush.msra.mxu0 0.0
        %477 = vmatpush.msra.mxu0 0.0
        %478 = vmatpush.msra.mxu0 0.0
        %479 = vmatpush.msra.mxu0 0.0
        %480 = vmatpush.msra.mxu0 0.0
        %481 = vmatpush.msra.mxu0 0.0
        %482 = vmatpush.msra.mxu0 0.0
        %483 = vmatpush.msra.mxu0 %v180
        %484 = vmatpush.msra.mxu0 %v175
        %485 = vmatpush.msra.mxu0 %v173
        %486 = vmatpush.msra.mxu0 %v428
        %487 = vmatpush.msra.mxu0 %v426
        %488 = vmatpush.msra.mxu0 %v424
        %489 = vmatpush.msra.mxu0 %v422
        %490 = vmatmul.f32.gmra.mxu0 %v434
        %v491 = vpop.f32.mrf.mxu0
        %v492 = vadd.f32 0.0, %v491
        %493 = vmatmul.f32.gmra.mxu0 %v437
        %v494 = vpop.f32.mrf.mxu0
        %v495 = vadd.f32 0.0, %v494
        %496 = vmatmul.f32.gmra.mxu0 %v440
        %v497 = vpop.f32.mrf.mxu0
        %v498 = vadd.f32 0.0, %v497
        %499 = vmatmul.f32.gmra.mxu0 %v443
        %v500 = vpop.f32.mrf.mxu0
        %v501 = vadd.f32 0.0, %v500
        %502 = vdwg.mxu0
        %v503 = vmax.f32 %v463, 0.0
        %v504 = vmax.f32 %v492, 0.0
        %v505 = vmax.f32 %v466, 0.0
        %v506 = vmax.f32 %v495, 0.0
        %v507 = vmax.f32 %v469, 0.0
        %v508 = vmax.f32 %v498, 0.0
        %v509 = vmax.f32 %v472, 0.0
        %v510 = vmax.f32 %v501, 0.0
        %v511 = vld [vmem:[%s1 + $0x80] sm:$0xff]
        %v513 = vsel %vm268, %v511, 0
        %515 = vmatpush.msra.mxu0 0.0
        %516 = vmatpush.msra.mxu0 0.0
        %517 = vmatpush.msra.mxu0 0.0
        %518 = vmatpush.msra.mxu0 0.0
        %519 = vmatpush.msra.mxu0 0.0
        %520 = vmatpush.msra.mxu0 0.0
        %521 = vmatpush.msra.mxu0 0.0
        %522 = vmatpush.msra.mxu0 0.0
        %523 = vmatpush.msra.mxu0 0.0
        %524 = vmatpush.msra.mxu0 %v180
        %525 = vmatpush.msra.mxu0 %v174
        %526 = vmatpush.msra.mxu0 %v172
        %527 = vmatpush.msra.mxu0 %v509
        %528 = vmatpush.msra.mxu0 %v507
        %529 = vmatpush.msra.mxu0 %v505
        %530 = vmatpush.msra.mxu0 %v503
        %531 = vmatmul.f32.gmra.mxu0 %v513
        %v532 = vpop.f32.mrf.mxu0
        %v533 = vadd.f32 0.0, %v532
        %534 = vdwg.mxu0
        %535 = vmatpush.msra.mxu0 0.0
        %536 = vmatpush.msra.mxu0 0.0
        %537 = vmatpush.msra.mxu0 0.0
        %538 = vmatpush.msra.mxu0 0.0
        %539 = vmatpush.msra.mxu0 0.0
        %540 = vmatpush.msra.mxu0 0.0
        %541 = vmatpush.msra.mxu0 0.0
        %542 = vmatpush.msra.mxu0 0.0
        %543 = vmatpush.msra.mxu0 0.0
        %544 = vmatpush.msra.mxu0 %v180
        %545 = vmatpush.msra.mxu0 %v175
        %546 = vmatpush.msra.mxu0 %v173
        %547 = vmatpush.msra.mxu0 %v510
        %548 = vmatpush.msra.mxu0 %v508
        %549 = vmatpush.msra.mxu0 %v506
        %550 = vmatpush.msra.mxu0 %v504
        %551 = vmatmul.f32.gmra.mxu0 %v513
        %v552 = vpop.f32.mrf.mxu0
        %v553 = vadd.f32 0.0, %v552
        %554 = vdwg.mxu0
        %555 = vst [vmem:[%s170] sm:$0xff] %v533
        %556 = vst [vmem:[%s170 + $0x8] sm:$0xff] %v553
        %s557 = smul.u32 2, %s13
        %p558 = scmp.lt.s32.totalorder %s557, 3
        %s559 = scalar_select %p558, %s557, 3
        %s560 = smul.addr %s559, 8
        %s561 = scalar_lea.vmem %s2, %s560
        // Predicated region
        $region52: #{mlp_forward.1} parent=46 // pred_check
          %p562 = pneg %p78
        $region53: #{mlp_forward.1} parent=46 // pred_check_branch
          %564 = sbr.rel (%p562) target = $region55
        $region54: #{mlp_forward.1} parent=46 // pred_region
          %s565 = smul.u32 2, %s13
        $region55: #{mlp_forward.1} parent=46 // pred_fallthru
          _
      $region47: #{mlp_forward.1} parent=5 // pred_fallthru
        _
      %p566 = scmp.le.s32.totalorder 2, %s8
      // Predicated region
      $region56: #{mlp_forward.1} parent=5 // pred_check
        %p567 = pneg %p566
      $region57: #{mlp_forward.1} parent=5 // pred_check_branch
        %569 = sbr.rel (%p567) target = $region59
      $region58: #{mlp_forward.1} parent=5 // pred_region
        %s570 = ssub.s32 %s8, 2
        // Predicated region
        $region60: #{mlp_forward.1} parent=58 // pred_check
          %p571 = pneg %p84
        $region61: #{mlp_forward.1} parent=58 // pred_check_branch
          %573 = sbr.rel (%p571) target = $region63
        $region62: #{mlp_forward.1} parent=58 // pred_region
          %s574 = smul.u32 2, %s14
          %p575 = scmp.lt.s32.totalorder %s574, 3
          %s576 = scalar_select %p575, %s574, 3
          %s577 = smul.addr %s576, 8
          %s578 = scalar_lea.vmem %s2, %s577
        $region63: #{mlp_forward.1} parent=58 // pred_fallthru
          _
      $region59: #{mlp_forward.1} parent=5 // pred_fallthru
        _
    $region6: #{mlp_forward.1} parent=1 // loop_footer
      %s12 = sadd.s32 1, %s8
    $region7: #{mlp_forward.1} parent=1 // loop_footer_branch
      %7 = sbr.rel target = $region3
    $region8: #{mlp_forward.1} parent=1 // loop_exit
      _

</llo_original>
